<compile_context>
chip_gen: v7x
topology: tpu7x:2x2x1
jax: 0.10.0
libtpu: 0.0.40
codegen_flags: <defaults>
</compile_context>

<pallas_src>
import functools

import jax
import jax.numpy as jnp
from jax.experimental import pallas as pl
from jax.experimental.pallas import tpu as pltpu


def _round_up(x, m):
    return (x + m - 1) // m * m


def _conv_stats_kernel(x_ref, w_ref, y_ref, stats_ref, acc_ref):
    """Pass 1: tiled im2col matmul + per-tile per-channel sum / sum-of-squares.

    x_ref     : (TM, TK)      im2col tile
    w_ref     : (TK, Cp)      weight tile
    y_ref     : (TM, Cp)      conv output tile (f32, pre-BN)
    stats_ref : (1, 2, Cp)    [sum, sumsq] over this M tile
    acc_ref   : (TM, Cp) f32  VMEM scratch accumulator
    """
    k = pl.program_id(1)

    @pl.when(k == 0)
    def _():
        acc_ref[...] = jnp.zeros_like(acc_ref)

    acc_ref[...] += jnp.dot(x_ref[...], w_ref[...],
                            preferred_element_type=jnp.float32)

    @pl.when(k == pl.num_programs(1) - 1)
    def _():
        y = acc_ref[...]
        y_ref[...] = y.astype(y_ref.dtype)
        s = jnp.sum(y, axis=0, keepdims=True)        # (1, Cp)
        sq = jnp.sum(y * y, axis=0, keepdims=True)   # (1, Cp)
        stats_ref[...] = jnp.concatenate([s, sq], axis=0)[None, :, :]


def _bn_relu_kernel(y_ref, scale_ref, shift_ref, out_ref):
    """Pass 2: out = relu(y * scale + shift), lane-dense Cp channels."""
    y = y_ref[...].astype(jnp.float32)
    out_ref[...] = jnp.maximum(
        y * scale_ref[...] + shift_ref[...], 0.0).astype(out_ref.dtype)


def conv2d_batchnorm_relu(x_nchw, weight_oihw, gamma, beta, *,
                          stride=1, padding=1, dilation=1, eps=1e-5,
                          tm=256, compute_dtype=jnp.float32):
    """conv2DBatchNormRelu forward: Conv2d(bias=False) + training-mode BN + ReLU.

    NCHW in / NCHW out.  `compute_dtype=jnp.bfloat16` feeds the MXU bf16 while
    keeping f32 accumulation and f32 BN statistics (v6e/v7x).  Default f32 to
    match the f32 reference within 1e-4.
    """
    N, C_in, H, W = x_nchw.shape
    C_out, C_in_w, KH, KW = weight_oihw.shape
    assert C_in == C_in_w
    OH = (H + 2 * padding - dilation * (KH - 1) - 1) // stride + 1
    OW = (W + 2 * padding - dilation * (KW - 1) - 1) // stride + 1
    M = N * OH * OW
    K = KH * KW * C_in

    # ---- wrapper glue (XLA): NCHW->NHWC, zero-pad, im2col, pad to tiles ----
    x_nhwc = jnp.transpose(x_nchw, (0, 2, 3, 1))
    xp = jnp.pad(x_nhwc,
                 ((0, 0), (padding, padding), (padding, padding), (0, 0)))
    taps = []
    for kh in range(KH):
        for kw in range(KW):
            h0 = kh * dilation
            w0 = kw * dilation
            taps.append(xp[:, h0:h0 + stride * OH:stride,
                           w0:w0 + stride * OW:stride, :])   # (N, OH, OW, C_in)
    x_col = jnp.concatenate(taps, axis=-1).reshape(M, K)

    # Pad C_out to a lane multiple (128), K to the K tile, M to the M tile.
    # Padded rows/cols are zero, so padded output rows are exactly zero and
    # contribute nothing to the BN sums (divide by the true M below).
    Cp = _round_up(C_out, 128)
    Kp = _round_up(K, 128)
    tk = next(t for t in (512, 256, 128) if Kp % t == 0)
    Mp = _round_up(M, tm)

    x_col = jnp.pad(x_col, ((0, Mp - M), (0, Kp - K))).astype(compute_dtype)
    w2d = jnp.transpose(weight_oihw, (2, 3, 1, 0)).reshape(K, C_out)
    w2d = jnp.pad(w2d, ((0, Kp - K), (0, Cp - C_out))).astype(compute_dtype)

    grid_m, grid_k = Mp // tm, Kp // tk
    cparams = pltpu.CompilerParams(
        dimension_semantics=("parallel", "arbitrary"),
        vmem_limit_bytes=48 * 1024 * 1024)   # sized for v7x's 64 MiB VMEM

    # ---- pass 1: conv as tiled matmul + BN partial statistics ----
    y2d, part = pl.pallas_call(
        _conv_stats_kernel,
        out_shape=(jax.ShapeDtypeStruct((Mp, Cp), jnp.float32),
                   jax.ShapeDtypeStruct((grid_m, 2, Cp), jnp.float32)),
        grid=(grid_m, grid_k),
        in_specs=[
            pl.BlockSpec((tm, tk), lambda i, k: (i, k)),
            pl.BlockSpec((tk, Cp), lambda i, k: (k, 0)),
        ],
        out_specs=(
            pl.BlockSpec((tm, Cp), lambda i, k: (i, 0)),
            pl.BlockSpec((1, 2, Cp), lambda i, k: (i, 0, 0)),
        ),
        scratch_shapes=[pltpu.VMEM((tm, Cp), jnp.float32)],
        compiler_params=cparams,
    )(x_col, w2d)

    # ---- finalize batch statistics (tiny cross-tile reduction) ----
    sums = jnp.sum(part[:, 0, :], axis=0)
    sumsq = jnp.sum(part[:, 1, :], axis=0)
    mean = sums / M
    var = jnp.maximum(sumsq / M - mean * mean, 0.0)   # biased variance
    inv_std = jax.lax.rsqrt(var + eps)
    gamma_p = jnp.pad(gamma.astype(jnp.float32), (0, Cp - C_out),
                      constant_values=1.0)
    beta_p = jnp.pad(beta.astype(jnp.float32), (0, Cp - C_out))
    scale = (gamma_p * inv_std).reshape(1, Cp)
    shift = (beta_p - mean * gamma_p * inv_std).reshape(1, Cp)

    # ---- pass 2: normalize + ReLU over lane-dense tiles ----
    out2d = pl.pallas_call(
        _bn_relu_kernel,
        out_shape=jax.ShapeDtypeStruct((Mp, Cp), jnp.float32),
        grid=(grid_m,),
        in_specs=[
            pl.BlockSpec((tm, Cp), lambda i: (i, 0)),
            pl.BlockSpec((1, Cp), lambda i: (0, 0)),
            pl.BlockSpec((1, Cp), lambda i: (0, 0)),
        ],
        out_specs=pl.BlockSpec((tm, Cp), lambda i: (i, 0)),
        compiler_params=pltpu.CompilerParams(
            dimension_semantics=("parallel",),
            vmem_limit_bytes=48 * 1024 * 1024),
    )(y2d, scale, shift)

    out = out2d[:M, :C_out].reshape(N, OH, OW, C_out)
    return jnp.transpose(out, (0, 3, 1, 2))


def reference(x_nchw, weight_oihw, gamma, beta, *,
              stride=1, padding=1, dilation=1, eps=1e-5):
    """Pure-JAX reference: Conv2d + PyTorch training-mode BatchNorm2d + ReLU."""
    y = jax.lax.conv_general_dilated(
        x_nchw, weight_oihw, window_strides=(stride, stride),
        padding=((padding, padding), (padding, padding)),
        rhs_dilation=(dilation, dilation),
        dimension_numbers=("NCHW", "OIHW", "NCHW"))
    mean = jnp.mean(y, axis=(0, 2, 3), keepdims=True)
    var = jnp.mean((y - mean) ** 2, axis=(0, 2, 3), keepdims=True)
    yn = (y - mean) * jax.lax.rsqrt(var + eps)
    yn = yn * gamma[None, :, None, None] + beta[None, :, None, None]
    return jnp.maximum(yn, 0.0)


if __name__ == "__main__":
    key = jax.random.PRNGKey(0)

    # config 1: conv2DBatchNormRelu(4 -> 8, k=3, s=1, p=1, d=1, bias=False)
    N, C_in, H, W = 2, 4, 16, 16
    C_out, KH, KW = 8, 3, 3
    k1, k2, k3, k4, k5, k6 = jax.random.split(key, 6)
    x = jax.random.normal(k1, (N, C_in, H, W), dtype=jnp.float32)
    weight = jax.random.normal(k2, (C_out, C_in, KH, KW), dtype=jnp.float32) * 0.1
    gamma = 1.0 + 0.1 * jax.random.normal(k3, (C_out,), dtype=jnp.float32)
    beta = 0.1 * jax.random.normal(k4, (C_out,), dtype=jnp.float32)

    out = conv2d_batchnorm_relu(x, weight, gamma, beta,
                                stride=1, padding=1, dilation=1, eps=1e-5)
    out = jax.block_until_ready(out)
    ref = reference(x, weight, gamma, beta,
                    stride=1, padding=1, dilation=1, eps=1e-5)
    assert out.shape == (N, C_out, H, W)
    assert jnp.allclose(out, ref, rtol=1e-4, atol=1e-4), "mismatch (config 1)"

    # config 2: FeatureMap_convolution first layer style (3 -> 8, k=3, s=2, p=1)
    x2 = jax.random.normal(k5, (2, 3, 16, 16), dtype=jnp.float32)
    w2 = jax.random.normal(k6, (8, 3, 3, 3), dtype=jnp.float32) * 0.1
    g2 = jnp.ones((8,), dtype=jnp.float32)
    b2 = jnp.zeros((8,), dtype=jnp.float32)
    out2 = conv2d_batchnorm_relu(x2, w2, g2, b2,
                                 stride=2, padding=1, dilation=1, eps=1e-5)
    out2 = jax.block_until_ready(out2)
    ref2 = reference(x2, w2, g2, b2, stride=2, padding=1, dilation=1, eps=1e-5)
    assert out2.shape == (2, 8, 8, 8)
    assert jnp.allclose(out2, ref2, rtol=1e-4, atol=1e-4), "mismatch (config 2)"

    print("KERNEL_OK")
</pallas_src>

<mosaic_0001>
module attributes {stable_mosaic.version = 11 : i64} {
  func.func @_conv_stats_kernel(%arg0: i32, %arg1: i32, %arg2: memref<256x128xf32, #tpu.memory_space<vmem>>, %arg3: memref<128x128xf32, #tpu.memory_space<vmem>>, %arg4: memref<256x128xf32, #tpu.memory_space<vmem>>, %arg5: memref<1x2x128xf32, #tpu.memory_space<vmem>>, %arg6: memref<256x128xf32, #tpu.memory_space<vmem>>) attributes {dimension_semantics = [#tpu.dimension_semantics<parallel>, #tpu.dimension_semantics<arbitrary>], iteration_bounds = array<i64: 2, 1>, scalar_prefetch = 0 : i64, scratch_operands = 1 : i64, tpu.core_type = #tpu.core_type<tc>, window_params = [{transform_indices = @transform_0, window_bounds = array<i64: 256, 128>}, {transform_indices = @transform_1, window_bounds = array<i64: 128, 128>}, {transform_indices = @transform_2, window_bounds = array<i64: 256, 128>}, {transform_indices = @transform_3, window_bounds = array<i64: 1, 2, 128>}]} {
    %c0_i32 = arith.constant 0 : i32
    %0 = arith.cmpi eq, %arg1, %c0_i32 : i32
    %1 = arith.extui %0 : i1 to i32
    %c0_i32_0 = arith.constant 0 : i32
    %2 = arith.cmpi ne, %1, %c0_i32_0 : i32
    scf.if %2 {
      %cst_10 = arith.constant 0.000000e+00 : f32
      %12 = vector.broadcast %cst_10 : f32 to vector<256x128xf32>
      %c0_11 = arith.constant 0 : index
      %c0_12 = arith.constant 0 : index
      %13 = vector.load %arg6[%c0_11, %c0_12] : memref<256x128xf32, #tpu.memory_space<vmem>>, vector<256x128xf32>
      tpu.vector_store %arg6[%c0_11, %c0_12], %12 {strides = array<i32>} : memref<256x128xf32, #tpu.memory_space<vmem>>, vector<256x128xf32>,
    } else {
    }
    %c0 = arith.constant 0 : index
    %c0_1 = arith.constant 0 : index
    %3 = vector.load %arg6[%c0, %c0_1] : memref<256x128xf32, #tpu.memory_space<vmem>>, vector<256x128xf32>
    %c0_2 = arith.constant 0 : index
    %c0_3 = arith.constant 0 : index
    %4 = vector.load %arg2[%c0_2, %c0_3] : memref<256x128xf32, #tpu.memory_space<vmem>>, vector<256x128xf32>
    %c0_4 = arith.constant 0 : index
    %c0_5 = arith.constant 0 : index
    %5 = vector.load %arg3[%c0_4, %c0_5] : memref<128x128xf32, #tpu.memory_space<vmem>>, vector<128x128xf32>
    %cst = arith.constant dense<0.000000e+00> : vector<256x128xf32>
    %6 = tpu.matmul %4, %5, %cst {dimension_numbers = #tpu.dot_dimension_numbers<[1], [0], [0], [1], [0, 0, 1, 1], [], []>} : vector<256x128xf32>, vector<128x128xf32>, vector<256x128xf32> -> vector<256x128xf32>
    %7 = arith.addf %3, %6 : vector<256x128xf32>
    %c0_6 = arith.constant 0 : index
    %c0_7 = arith.constant 0 : index
    %8 = vector.load %arg6[%c0_6, %c0_7] : memref<256x128xf32, #tpu.memory_space<vmem>>, vector<256x128xf32>
    tpu.vector_store %arg6[%c0_6, %c0_7], %7 {strides = array<i32>} : memref<256x128xf32, #tpu.memory_space<vmem>>, vector<256x128xf32>,
    %c0_i32_8 = arith.constant 0 : i32
    %9 = arith.cmpi eq, %arg1, %c0_i32_8 : i32
    %10 = arith.extui %9 : i1 to i32
    %c0_i32_9 = arith.constant 0 : i32
    %11 = arith.cmpi ne, %10, %c0_i32_9 : i32
    scf.if %11 {
      %c0_10 = arith.constant 0 : index
      %c0_11 = arith.constant 0 : index
      %12 = vector.load %arg6[%c0_10, %c0_11] : memref<256x128xf32, #tpu.memory_space<vmem>>, vector<256x128xf32>
      %c0_12 = arith.constant 0 : index
      %c0_13 = arith.constant 0 : index
      %13 = vector.load %arg4[%c0_12, %c0_13] : memref<256x128xf32, #tpu.memory_space<vmem>>, vector<256x128xf32>
      tpu.vector_store %arg4[%c0_12, %c0_13], %12 {strides = array<i32>} : memref<256x128xf32, #tpu.memory_space<vmem>>, vector<256x128xf32>,
      %cst_14 = arith.constant dense<0.000000e+00> : vector<128xf32>
      %14 = vector.multi_reduction <add>, %12, %cst_14 [0] : vector<256x128xf32> to vector<128xf32>
      %15 = vector.shape_cast %14 : vector<128xf32> to vector<1x128xf32>
      %16 = arith.mulf %12, %12 : vector<256x128xf32>
      %cst_15 = arith.constant dense<0.000000e+00> : vector<128xf32>
      %17 = vector.multi_reduction <add>, %16, %cst_15 [0] : vector<256x128xf32> to vector<128xf32>
      %18 = vector.shape_cast %17 : vector<128xf32> to vector<1x128xf32>
      %19 = tpu.concatenate %15, %18 in 0 : vector<1x128xf32>, vector<1x128xf32> -> vector<2x128xf32>
      %20 = vector.shape_cast %19 : vector<2x128xf32> to vector<1x2x128xf32>
      %c0_16 = arith.constant 0 : index
      %c0_17 = arith.constant 0 : index
      %c0_18 = arith.constant 0 : index
      %21 = vector.load %arg5[%c0_16, %c0_17, %c0_18] : memref<1x2x128xf32, #tpu.memory_space<vmem>>, vector<1x2x128xf32>
      tpu.vector_store %arg5[%c0_16, %c0_17, %c0_18], %20 {strides = array<i32>} : memref<1x2x128xf32, #tpu.memory_space<vmem>>, vector<1x2x128xf32>,
    } else {
    }
    return
  }
  func.func @transform_0(%arg0: i32, %arg1: i32) -> (i32, i32) {
    %c0_i32 = arith.constant 0 : i32
    return %arg0, %arg1 : i32, i32
  }
  func.func @transform_1(%arg0: i32, %arg1: i32) -> (i32, i32) {
    %c0_i32 = arith.constant 0 : i32
    %c0_i32_0 = arith.constant 0 : i32
    return %arg1, %c0_i32 : i32, i32
  }
  func.func @transform_2(%arg0: i32, %arg1: i32) -> (i32, i32) {
    %c0_i32 = arith.constant 0 : i32
    %c0_i32_0 = arith.constant 0 : i32
    return %arg0, %c0_i32 : i32, i32
  }
  func.func @transform_3(%arg0: i32, %arg1: i32) -> (i32, i32, i32) {
    %c0_i32 = arith.constant 0 : i32
    %c0_i32_0 = arith.constant 0 : i32
    %c0_i32_1 = arith.constant 0 : i32
    return %arg0, %c0_i32, %c0_i32_0 : i32, i32, i32
  }
}

</mosaic_0001>

<llo_original>
// kernel: tpu_custom_call.1
$region0: #{tpu_custom_call.1}
  #allocation0 [shape = 'u32[]', space=smem, size = 0x4, offset = 0x4, fixed_abs, tag = 'smem constant byte address 0x4 - core index']
  #allocation1 [shape = 'u32[144,128]{1,0:T(1,128)}', space=vmem, size = 0x12000, scoped, tag = 'internal scratch']
  #allocation2 [shape = 'f32[256,128]{1,0:T(8,128)}', space=vmem, size = 0x20000, scoped, tag = 'scratch operand']
  %s0 = inlined_call_operand.hbm [shape: f32[512,128], index: 0, kind: input, shape index: {}]
  %s1 = inlined_call_operand.hbm [shape: f32[128,128], index: 1, kind: input, shape index: {}]
  %s2 = inlined_call_operand.hbm [shape: f32[512,128], index: 2, kind: output, shape index: {0}]
  %s3 = inlined_call_operand.hbm [shape: f32[2,2,128], index: 3, kind: output, shape index: {1}]
  %4 = xla_tuple %s2, %s3
  %s5 = sld [smem:[#allocation0]]
  $region65: #{tpu_custom_call.1} parent=0
    _
  %s7 = ssub.s32 1, %s5
  %s8 = scalar_select 0, %s7, %s5
  $region1: #{tpu_custom_call.1} parent=0
    #allocation3 [shape = 'u8[262144]{0}', space=vmem, size = 0x40000, scoped, tag = 'input window, operand 0']
    #allocation4 [shape = 's32[2]{0}', space=sflag, size = 0x8, scoped, tag = 'scoped memory for tpu_custom_call.1']
    #allocation5 [shape = 's32[2]{0}', space=sflag, size = 0x8, scoped, tag = 'scoped memory for tpu_custom_call.1']
    #allocation6 [shape = 'u8[65536]{0}', space=vmem, size = 0x10000, scoped, tag = 'input window, operand 1, single buffered']
    #allocation7 [shape = 's32[1]{0}', space=sflag, size = 0x4, scoped, tag = 'scoped memory for tpu_custom_call.1']
    #allocation8 [shape = 'u8[262144]{0}', space=vmem, size = 0x40000, scoped, tag = 'output window, operand 0']
    #allocation9 [shape = 'u8[2048]{0}', space=vmem, size = 0x800, scoped, tag = 'output window, operand 1']
    #allocation10 [shape = 's32[2]{0}', space=sflag, size = 0x8, scoped, tag = 'scoped memory for tpu_custom_call.1']
    %9 = vsyncpa [#allocation4], 0
    %s10 = scalar_lea.sflag [#allocation4], 1
    %11 = vsyncpa %s10, 0
    %12 = vsyncpa [#allocation7], 0
    %13 = vsyncpa [#allocation5], 0
    %s14 = scalar_lea.sflag [#allocation5], 1
    %15 = vsyncpa %s14, 0
    %16 = vsyncpa [#allocation10], 0
    %s17 = scalar_lea.sflag [#allocation10], 1
    %18 = vsyncpa %s17, 0
    loop: start=0, step=1, limit=4
    $region2: #{tpu_custom_call.1} parent=1 // loop_pre_header
      _
    $region3: #{tpu_custom_call.1} parent=1 // loop_header
      %s20 = sphi 0, %s24
      %p21 = scmp.ge.s32.totalorder %s20, 4
      %s27 = sphi 0, %s39
      %s28 = sphi 0, %s35
      %s29 = sphi 0, %s27
      %s30 = sphi 0, %s28
      %s31 = sphi 0, %s29
      %s32 = sphi 0, %s30
      %s44 = sphi 0, %s46
      %s47 = sphi 0, %s44
      %s48 = sphi 0, %s47
      %s64 = sphi 0, %s48
      %s70 = sphi 0, %s72
      %s73 = sphi 0, %s70
      %s74 = sphi 0, %s73
      %s90 = sphi 0, %s74
      %s96 = sphi 0, %s98
      %s99 = sphi 0, %s96
      %s100 = sphi 0, %s99
      %s116 = sphi 0, %s100
      %s122 = sphi 0, %s124
      %s125 = sphi 0, %s122
      %s126 = sphi 0, %s125
      %s142 = sphi 0, %s126
    $region4: #{tpu_custom_call.1} parent=1 // loop_header_branch
      %23 = sbr.rel (%p21) target = $region8
    $region5: #{tpu_custom_call.1} parent=1 // loop_body
      %s25 = ssub.s32 %s20, 1
      %s26 = ssub.s32 %s20, 2
      %s33 = sadd.s32 1, %s28
      %p34 = scmp.ge.s32.totalorder %s33, 1
      %s35 = scalar_select %p34, 0, %s33
      %s36 = sadd.s32 1, %s27
      %s37 = scalar_select %p34, %s36, %s27
      %p38 = scmp.ge.s32.totalorder %s37, 2
      %s39 = scalar_select %p38, 0, %s37
      %s40 = ssub.s32 %s27, %s39
      %s41 = ssub.s32 %s28, %s35
      %s42 = sor.u32 %s40, %s41
      %p43 = scmp.eq.s32.totalorder %s42, 0
      %s45 = sadd.s32 %s44, 1
      %s46 = scalar_select %p43, %s44, %s45
      %p49 = pneg %p43
      %p50 = scmp.eq.s32.totalorder %s20, 1
      %p51 = por %p49, %p50
      %p52 = scmp.ne.s32.totalorder %s44, %s47
      %p53 = scmp.eq.s32.totalorder %s20, 0
      %p54 = por %p52, %p53
      %p55 = scmp.ne.s32.totalorder %s44, %s47
      %p56 = scmp.eq.s32.totalorder %s25, 1
      %p57 = por %p55, %p56
      %p58 = scmp.ne.s32.totalorder %s47, %s48
      %p59 = scmp.eq.s32.totalorder %s25, 0
      %p60 = por %p58, %p59
      %p61 = scmp.ne.s32.totalorder %s47, %s48
      %p62 = scmp.eq.s32.totalorder %s26, 1
      %p63 = por %p61, %p62
      %p65 = scmp.ne.s32.totalorder %s48, %s64
      %p66 = scmp.eq.s32.totalorder %s26, 0
      %p67 = por %p65, %p66
      %s68 = ssub.s32 %s28, %s35
      %p69 = scmp.eq.s32.totalorder %s68, 0
      %s71 = sadd.s32 %s70, 1
      %s72 = scalar_select %p69, %s70, %s71
      %p75 = pneg %p69
      %p76 = scmp.eq.s32.totalorder %s20, 1
      %p77 = por %p75, %p76
      %p78 = scmp.ne.s32.totalorder %s70, %s73
      %p79 = scmp.eq.s32.totalorder %s20, 0
      %p80 = por %p78, %p79
      %p81 = scmp.ne.s32.totalorder %s70, %s73
      %p82 = scmp.eq.s32.totalorder %s25, 1
      %p83 = por %p81, %p82
      %p84 = scmp.ne.s32.totalorder %s73, %s74
      %p85 = scmp.eq.s32.totalorder %s25, 0
      %p86 = por %p84, %p85
      %p87 = scmp.ne.s32.totalorder %s73, %s74
      %p88 = scmp.eq.s32.totalorder %s26, 1
      %p89 = por %p87, %p88
      %p91 = scmp.ne.s32.totalorder %s74, %s90
      %p92 = scmp.eq.s32.totalorder %s26, 0
      %p93 = por %p91, %p92
      %s94 = ssub.s32 %s27, %s39
      %p95 = scmp.eq.s32.totalorder %s94, 0
      %s97 = sadd.s32 %s96, 1
      %s98 = scalar_select %p95, %s96, %s97
      %p101 = pneg %p95
      %p102 = scmp.eq.s32.totalorder %s20, 1
      %p103 = por %p101, %p102
      %p104 = scmp.ne.s32.totalorder %s96, %s99
      %p105 = scmp.eq.s32.totalorder %s20, 0
      %p106 = por %p104, %p105
      %p107 = scmp.ne.s32.totalorder %s96, %s99
      %p108 = scmp.eq.s32.totalorder %s25, 1
      %p109 = por %p107, %p108
      %p110 = scmp.ne.s32.totalorder %s99, %s100
      %p111 = scmp.eq.s32.totalorder %s25, 0
      %p112 = por %p110, %p111
      %p113 = scmp.ne.s32.totalorder %s99, %s100
      %p114 = scmp.eq.s32.totalorder %s26, 1
      %p115 = por %p113, %p114
      %p117 = scmp.ne.s32.totalorder %s100, %s116
      %p118 = scmp.eq.s32.totalorder %s26, 0
      %p119 = por %p117, %p118
      %s120 = ssub.s32 %s27, %s39
      %p121 = scmp.eq.s32.totalorder %s120, 0
      %s123 = sadd.s32 %s122, 1
      %s124 = scalar_select %p121, %s122, %s123
      %p127 = pneg %p121
      %p128 = scmp.eq.s32.totalorder %s20, 1
      %p129 = por %p127, %p128
      %p130 = scmp.ne.s32.totalorder %s122, %s125
      %p131 = scmp.eq.s32.totalorder %s20, 0
      %p132 = por %p130, %p131
      %p133 = scmp.ne.s32.totalorder %s122, %s125
      %p134 = scmp.eq.s32.totalorder %s25, 1
      %p135 = por %p133, %p134
      %p136 = scmp.ne.s32.totalorder %s125, %s126
      %p137 = scmp.eq.s32.totalorder %s25, 0
      %p138 = por %p136, %p137
      %p139 = scmp.ne.s32.totalorder %s125, %s126
      %p140 = scmp.eq.s32.totalorder %s26, 1
      %p141 = por %p139, %p140
      %p143 = scmp.ne.s32.totalorder %s126, %s142
      %p144 = scmp.eq.s32.totalorder %s26, 0
      %p145 = por %p143, %p144
      %p146 = scmp.le.s32.totalorder 1, %s20
      %p147 = scmp.lt.s32.totalorder %s20, 3
      %p148 = pnand %p146, %p147
      %p149 = pneg %p148
      // Predicated region
      $region9: #{tpu_custom_call.1} parent=5 // pred_check
        _
      $region10: #{tpu_custom_call.1} parent=5 // pred_check_branch
        %151 = sbr.rel (%p148) target = $region12
      $region11: #{tpu_custom_call.1} parent=5 // pred_region
        %s152 = ssub.s32 %s20, 1
        // Predicated region
        $region13: #{tpu_custom_call.1} parent=11 // pred_check
          %p153 = pneg %p86
        $region14: #{tpu_custom_call.1} parent=11 // pred_check_branch
          %155 = sbr.rel (%p153) target = $region16
        $region15: #{tpu_custom_call.1} parent=11 // pred_region
          %s156 = smul.u32 16, %s30
          %s158 = ssub.s32 2048, 2048
          %159 = vsyncadd [#allocation7], %s158
          %s160 = smul.addr %s156, 128
          %s161 = scalar_lea.hbm %s1, %s160
          %s162 = sshll.u32 [#allocation6], 4
          %s163 = int_to_ptr.vmem [resolvable:$true] %s162
          %168 = dma.hbm_to_vmem [thread:$0]  %s161, 2048, %s163, [#allocation7], 128, 128, 8
        $region16: #{tpu_custom_call.1} parent=11 // pred_fallthru
          _
      $region12: #{tpu_custom_call.1} parent=5 // pred_fallthru
        _
      %p169 = scmp.lt.s32.totalorder %s20, 2
      // Predicated region
      $region17: #{tpu_custom_call.1} parent=5 // pred_check
        %p170 = pneg %p169
      $region18: #{tpu_custom_call.1} parent=5 // pred_check_branch
        %172 = sbr.rel (%p170) target = $region20
      $region19: #{tpu_custom_call.1} parent=5 // pred_region
        // Predicated region
        $region21: #{tpu_custom_call.1} parent=19 // pred_check
          %p173 = pneg %p54
        $region22: #{tpu_custom_call.1} parent=19 // pred_check_branch
          %175 = sbr.rel (%p173) target = $region24
        $region23: #{tpu_custom_call.1} parent=19 // pred_region
          %s176 = sand.u32 %s44, 1
          %s177 = scalar_lea.sflag [#allocation4], %s176
          %s178 = sand.u32 %s44, 1
          %s179 = smul.addr %s178, 256
          %s180 = scalar_lea.vmem [#allocation3], %s179
          %s181 = smul.u32 32, %s27
          %s183 = ssub.s32 4096, 4096
          %184 = vsyncadd %s177, %s183
          %s185 = sadd.s32 %s28, %s181
          %s186 = smul.addr %s185, 128
          %s187 = scalar_lea.hbm %s0, %s186
          %s188 = sshll.u32 %s180, 4
          %s189 = int_to_ptr.vmem [resolvable:$true] %s188
          %194 = dma.hbm_to_vmem [thread:$0]  %s187, 4096, %s189, %s177, 128, 128, 8
        $region24: #{tpu_custom_call.1} parent=19 // pred_fallthru
          _
      $region20: #{tpu_custom_call.1} parent=5 // pred_fallthru
        _
      %p195 = scmp.le.s32.totalorder 1, %s20
      %p196 = scmp.lt.s32.totalorder %s20, 3
      %p197 = pnand %p195, %p196
      %p198 = pneg %p197
      // Predicated region
      $region25: #{tpu_custom_call.1} parent=5 // pred_check
        _
      $region26: #{tpu_custom_call.1} parent=5 // pred_check_branch
        %200 = sbr.rel (%p197) target = $region28
      $region27: #{tpu_custom_call.1} parent=5 // pred_region
        %s201 = ssub.s32 %s20, 1
        %s202 = sand.u32 %s47, 1
        %s203 = scalar_lea.sflag [#allocation4], %s202
        %s204 = sand.u32 %s47, 1
        %s205 = smul.addr %s204, 256
        %s206 = scalar_lea.vmem [#allocation3], %s205
        // Predicated region
        $region29: #{tpu_custom_call.1} parent=27 // pred_check
          %p207 = pneg %p60
        $region30: #{tpu_custom_call.1} parent=27 // pred_check_branch
          %209 = sbr.rel (%p207) target = $region32
        $region31: #{tpu_custom_call.1} parent=27 // pred_region
          %210 = dma.done %s203, 4096
        $region32: #{tpu_custom_call.1} parent=27 // pred_fallthru
          _
        // Predicated region
        $region33: #{tpu_custom_call.1} parent=27 // pred_check
          %p211 = pneg %p86
        $region34: #{tpu_custom_call.1} parent=27 // pred_check_branch
          %213 = sbr.rel (%p211) target = $region36
        $region35: #{tpu_custom_call.1} parent=27 // pred_region
          %214 = dma.done [#allocation7], 2048
        $region36: #{tpu_custom_call.1} parent=27 // pred_fallthru
          _
        %s215 = sand.u32 %s47, 1
        %s216 = scalar_lea.sflag [#allocation4], %s215
        %s217 = sand.u32 %s47, 1
        %s218 = smul.addr %s217, 256
        %s219 = scalar_lea.vmem [#allocation3], %s218
        %p220 = pneg %p60
        %p221 = pneg %p57
        %p222 = pneg %p86
        %p223 = pneg %p83
        %p224 = pneg %p112
        %p225 = pneg %p109
        %s226 = sand.u32 %s99, 1
        %s227 = scalar_lea.sflag [#allocation5], %s226
        %s228 = sand.u32 %s99, 1
        %s229 = smul.addr %s228, 256
        %s230 = scalar_lea.vmem [#allocation8], %s229
        %p231 = pneg %p138
        %p232 = pneg %p135
        %s233 = sand.u32 %s125, 1
        %s234 = scalar_lea.sflag [#allocation10], %s233
        %s235 = sand.u32 %s125, 1
        %s236 = smul.addr %s235, 2
        %s237 = scalar_lea.vmem [#allocation9], %s236
        %s238 = smul.u32 32, %s29
        %s239 = smul.u32 16, %s30
        %s240 = smul.u32 32, %s29
        %p241 = scmp.eq.s32.totalorder %s30, 0
        // Predicated region
        $region37: #{tpu_custom_call.1} parent=27 // pred_check
          %p242 = pneg %p241
        $region38: #{tpu_custom_call.1} parent=27 // pred_check_branch
          %244 = sbr.rel (%p242) target = $region40
        $region39: #{tpu_custom_call.1} parent=27 // pred_region
          %245 = vst [vmem:[#allocation2] sm:$0xff] 0.0
          %246 = vst [vmem:[#allocation2 + $0x8] sm:$0xff] 0.0
          %247 = vst [vmem:[#allocation2 + $0x10] sm:$0xff] 0.0
          %248 = vst [vmem:[#allocation2 + $0x18] sm:$0xff] 0.0
          %249 = vst [vmem:[#allocation2 + $0x20] sm:$0xff] 0.0
          %250 = vst [vmem:[#allocation2 + $0x28] sm:$0xff] 0.0
          %251 = vst [vmem:[#allocation2 + $0x30] sm:$0xff] 0.0
          %252 = vst [vmem:[#allocation2 + $0x38] sm:$0xff] 0.0
          %253 = vst [vmem:[#allocation2 + $0x40] sm:$0xff] 0.0
          %254 = vst [vmem:[#allocation2 + $0x48] sm:$0xff] 0.0
          %255 = vst [vmem:[#allocation2 + $0x50] sm:$0xff] 0.0
          %256 = vst [vmem:[#allocation2 + $0x58] sm:$0xff] 0.0
          %257 = vst [vmem:[#allocation2 + $0x60] sm:$0xff] 0.0
          %258 = vst [vmem:[#allocation2 + $0x68] sm:$0xff] 0.0
          %259 = vst [vmem:[#allocation2 + $0x70] sm:$0xff] 0.0
          %260 = vst [vmem:[#allocation2 + $0x78] sm:$0xff] 0.0
          %261 = vst [vmem:[#allocation2 + $0x80] sm:$0xff] 0.0
          %262 = vst [vmem:[#allocation2 + $0x88] sm:$0xff] 0.0
          %263 = vst [vmem:[#allocation2 + $0x90] sm:$0xff] 0.0
          %264 = vst [vmem:[#allocation2 + $0x98] sm:$0xff] 0.0
          %265 = vst [vmem:[#allocation2 + $0xa0] sm:$0xff] 0.0
          %266 = vst [vmem:[#allocation2 + $0xa8] sm:$0xff] 0.0
          %267 = vst [vmem:[#allocation2 + $0xb0] sm:$0xff] 0.0
          %268 = vst [vmem:[#allocation2 + $0xb8] sm:$0xff] 0.0
          %269 = vst [vmem:[#allocation2 + $0xc0] sm:$0xff] 0.0
          %270 = vst [vmem:[#allocation2 + $0xc8] sm:$0xff] 0.0
          %271 = vst [vmem:[#allocation2 + $0xd0] sm:$0xff] 0.0
          %272 = vst [vmem:[#allocation2 + $0xd8] sm:$0xff] 0.0
          %273 = vst [vmem:[#allocation2 + $0xe0] sm:$0xff] 0.0
          %274 = vst [vmem:[#allocation2 + $0xe8] sm:$0xff] 0.0
          %275 = vst [vmem:[#allocation2 + $0xf0] sm:$0xff] 0.0
          %276 = vst [vmem:[#allocation2 + $0xf8] sm:$0xff] 0.0
        $region40: #{tpu_custom_call.1} parent=27 // pred_fallthru
          _
        %v277 = vld [vmem:[#allocation2] sm:$0xff]
        %v278 = vld [vmem:[#allocation2 + $0x8] sm:$0xff]
        %v279 = vld [vmem:[#allocation2 + $0x10] sm:$0xff]
        %v280 = vld [vmem:[#allocation2 + $0x18] sm:$0xff]
        %v281 = vld [vmem:[#allocation2 + $0x20] sm:$0xff]
        %v282 = vld [vmem:[#allocation2 + $0x28] sm:$0xff]
        %v283 = vld [vmem:[#allocation2 + $0x30] sm:$0xff]
        %v284 = vld [vmem:[#allocation2 + $0x38] sm:$0xff]
        %v285 = vld [vmem:[#allocation2 + $0x40] sm:$0xff]
        %v286 = vld [vmem:[#allocation2 + $0x48] sm:$0xff]
        %v287 = vld [vmem:[#allocation2 + $0x50] sm:$0xff]
        %v288 = vld [vmem:[#allocation2 + $0x58] sm:$0xff]
        %v289 = vld [vmem:[#allocation2 + $0x60] sm:$0xff]
        %v290 = vld [vmem:[#allocation2 + $0x68] sm:$0xff]
        %v291 = vld [vmem:[#allocation2 + $0x70] sm:$0xff]
        %v292 = vld [vmem:[#allocation2 + $0x78] sm:$0xff]
        %v293 = vld [vmem:[#allocation2 + $0x80] sm:$0xff]
        %v294 = vld [vmem:[#allocation2 + $0x88] sm:$0xff]
        %v295 = vld [vmem:[#allocation2 + $0x90] sm:$0xff]
        %v296 = vld [vmem:[#allocation2 + $0x98] sm:$0xff]
        %v297 = vld [vmem:[#allocation2 + $0xa0] sm:$0xff]
        %v298 = vld [vmem:[#allocation2 + $0xa8] sm:$0xff]
        %v299 = vld [vmem:[#allocation2 + $0xb0] sm:$0xff]
        %v300 = vld [vmem:[#allocation2 + $0xb8] sm:$0xff]
        %v301 = vld [vmem:[#allocation2 + $0xc0] sm:$0xff]
        %v302 = vld [vmem:[#allocation2 + $0xc8] sm:$0xff]
        %v303 = vld [vmem:[#allocation2 + $0xd0] sm:$0xff]
        %v304 = vld [vmem:[#allocation2 + $0xd8] sm:$0xff]
        %v305 = vld [vmem:[#allocation2 + $0xe0] sm:$0xff]
        %v306 = vld [vmem:[#allocation2 + $0xe8] sm:$0xff]
        %v307 = vld [vmem:[#allocation2 + $0xf0] sm:$0xff]
        %v308 = vld [vmem:[#allocation2 + $0xf8] sm:$0xff]
        %v309 = vld [vmem:[%s206] sm:$0xff]
        %v310 = vld [vmem:[%s206 + $0x8] sm:$0xff]
        %v311 = vld [vmem:[%s206 + $0x10] sm:$0xff]
        %v312 = vld [vmem:[%s206 + $0x18] sm:$0xff]
        %v313 = vld [vmem:[%s206 + $0x20] sm:$0xff]
        %v314 = vld [vmem:[%s206 + $0x28] sm:$0xff]
        %v315 = vld [vmem:[%s206 + $0x30] sm:$0xff]
        %v316 = vld [vmem:[%s206 + $0x38] sm:$0xff]
        %v317 = vld [vmem:[%s206 + $0x40] sm:$0xff]
        %v318 = vld [vmem:[%s206 + $0x48] sm:$0xff]
        %v319 = vld [vmem:[%s206 + $0x50] sm:$0xff]
        %v320 = vld [vmem:[%s206 + $0x58] sm:$0xff]
        %v321 = vld [vmem:[%s206 + $0x60] sm:$0xff]
        %v322 = vld [vmem:[%s206 + $0x68] sm:$0xff]
        %v323 = vld [vmem:[%s206 + $0x70] sm:$0xff]
        %v324 = vld [vmem:[%s206 + $0x78] sm:$0xff]
        %v325 = vld [vmem:[%s206 + $0x80] sm:$0xff]
        %v326 = vld [vmem:[%s206 + $0x88] sm:$0xff]
        %v327 = vld [vmem:[%s206 + $0x90] sm:$0xff]
        %v328 = vld [vmem:[%s206 + $0x98] sm:$0xff]
        %v329 = vld [vmem:[%s206 + $0xa0] sm:$0xff]
        %v330 = vld [vmem:[%s206 + $0xa8] sm:$0xff]
        %v331 = vld [vmem:[%s206 + $0xb0] sm:$0xff]
        %v332 = vld [vmem:[%s206 + $0xb8] sm:$0xff]
        %v333 = vld [vmem:[%s206 + $0xc0] sm:$0xff]
        %v334 = vld [vmem:[%s206 + $0xc8] sm:$0xff]
        %v335 = vld [vmem:[%s206 + $0xd0] sm:$0xff]
        %v336 = vld [vmem:[%s206 + $0xd8] sm:$0xff]
        %v337 = vld [vmem:[%s206 + $0xe0] sm:$0xff]
        %v338 = vld [vmem:[%s206 + $0xe8] sm:$0xff]
        %v339 = vld [vmem:[%s206 + $0xf0] sm:$0xff]
        %v340 = vld [vmem:[%s206 + $0xf8] sm:$0xff]
        %v341 = vld [vmem:[#allocation6] sm:$0xff]
        %v342 = vld [vmem:[#allocation6 + $0x8] sm:$0xff]
        %v343 = vld [vmem:[#allocation6 + $0x10] sm:$0xff]
        %v344 = vld [vmem:[#allocation6 + $0x18] sm:$0xff]
        %v345 = vld [vmem:[#allocation6 + $0x20] sm:$0xff]
        %v346 = vld [vmem:[#allocation6 + $0x28] sm:$0xff]
        %v347 = vld [vmem:[#allocation6 + $0x30] sm:$0xff]
        %v348 = vld [vmem:[#allocation6 + $0x38] sm:$0xff]
        %v349 = vld [vmem:[#allocation6 + $0x40] sm:$0xff]
        %v350 = vld [vmem:[#allocation6 + $0x48] sm:$0xff]
        %v351 = vld [vmem:[#allocation6 + $0x50] sm:$0xff]
        %v352 = vld [vmem:[#allocation6 + $0x58] sm:$0xff]
        %v353 = vld [vmem:[#allocation6 + $0x60] sm:$0xff]
        %v354 = vld [vmem:[#allocation6 + $0x68] sm:$0xff]
        %v355 = vld [vmem:[#allocation6 + $0x70] sm:$0xff]
        %v356 = vld [vmem:[#allocation6 + $0x78] sm:$0xff]
        %357 = vmatprep.subr.mxu0 0.0
        %358 = vmatpush1.msra.mxu0 %v341
        %359 = vmatprep.subr.mxu0 0.0
        %360 = vmatpush1.msra.mxu0 %v342
        %361 = vmatprep.subr.mxu0 0.0
        %362 = vmatpush1.msra.mxu0 %v343
        %363 = vmatprep.subr.mxu0 0.0
        %364 = vmatpush1.msra.mxu0 %v344
        %365 = vmatprep.subr.mxu0 0.0
        %366 = vmatpush1.msra.mxu0 %v345
        %367 = vmatprep.subr.mxu0 0.0
        %368 = vmatpush1.msra.mxu0 %v346
        %369 = vmatprep.subr.mxu0 0.0
        %370 = vmatpush1.msra.mxu0 %v347
        %371 = vmatprep.subr.mxu0 0.0
        %372 = vmatpush1.msra.mxu0 %v348
        %373 = vmatprep.subr.mxu0 0.0
        %374 = vmatpush1.msra.mxu0 %v349
        %375 = vmatprep.subr.mxu0 0.0
        %376 = vmatpush1.msra.mxu0 %v350
        %377 = vmatprep.subr.mxu0 0.0
        %378 = vmatpush1.msra.mxu0 %v351
        %379 = vmatprep.subr.mxu0 0.0
        %380 = vmatpush1.msra.mxu0 %v352
        %381 = vmatprep.subr.mxu0 0.0
        %382 = vmatpush1.msra.mxu0 %v353
        %383 = vmatprep.subr.mxu0 0.0
        %384 = vmatpush1.msra.mxu0 %v354
        %385 = vmatprep.subr.mxu0 0.0
        %386 = vmatpush1.msra.mxu0 %v355
        %387 = vmatprep.subr.mxu0 0.0
        %388 = vmatpush1.msra.mxu0 %v356
        %389 = vmatprep.subr.mxu0 0.0
        %390 = vmatpush1.msra.mxu0 0.0
        %391 = vmatprep.subr.mxu0 0.0
        %392 = vmatpush1.msra.mxu0 0.0
        %393 = vmatprep.subr.mxu0 0.0
        %394 = vmatpush1.msra.mxu0 0.0
        %395 = vmatprep.subr.mxu0 0.0
        %396 = vmatpush1.msra.mxu0 0.0
        %397 = vmatprep.subr.mxu0 0.0
        %398 = vmatpush1.msra.mxu0 0.0
        %399 = vmatprep.subr.mxu0 0.0
        %400 = vmatpush1.msra.mxu0 0.0
        %401 = vmatprep.subr.mxu0 0.0
        %402 = vmatpush1.msra.mxu0 0.0
        %403 = vmatprep.subr.mxu0 0.0
        %404 = vmatpush1.msra.mxu0 0.0
        %405 = vmatprep.subr.mxu0 0.0
        %406 = vmatpush1.msra.mxu0 0.0
        %407 = vmatprep.subr.mxu0 0.0
        %408 = vmatpush1.msra.mxu0 0.0
        %409 = vmatprep.subr.mxu0 0.0
        %410 = vmatpush1.msra.mxu0 0.0
        %411 = vmatprep.subr.mxu0 0.0
        %412 = vmatpush1.msra.mxu0 0.0
        %413 = vmatprep.subr.mxu0 0.0
        %414 = vmatpush1.msra.mxu0 0.0
        %415 = vmatprep.subr.mxu0 0.0
        %416 = vmatpush1.msra.mxu0 0.0
        %417 = vmatprep.subr.mxu0 0.0
        %418 = vmatpush1.msra.mxu0 0.0
        %419 = vmatprep.subr.mxu0 0.0
        %420 = vmatpush1.msra.mxu0 0.0
        %421 = vmatprep.mubr.f32.mxu0 0.0
        %422 = vmatmul.mubr.f32.gmra.mrb[0].mxu0 %v309
        %v423 = vpop.f32.mrb[0].mxu0
        %v424 = vadd.f32 0.0, %v423
        %v425 = vpop.f32.mrb[0].mxu0
        %426 = vmatprep.mubr.f32.mxu0 0.0
        %427 = vmatmul.mubr.f32.gmra.mrb[0].mxu0 %v310
        %v428 = vpop.f32.mrb[0].mxu0
        %v429 = vadd.f32 0.0, %v428
        %v430 = vpop.f32.mrb[0].mxu0
        %431 = vmatprep.mubr.f32.mxu0 0.0
        %432 = vmatmul.mubr.f32.gmra.mrb[0].mxu0 %v311
        %v433 = vpop.f32.mrb[0].mxu0
        %v434 = vadd.f32 0.0, %v433
        %v435 = vpop.f32.mrb[0].mxu0
        %436 = vmatprep.mubr.f32.mxu0 0.0
        %437 = vmatmul.mubr.f32.gmra.mrb[0].mxu0 %v312
        %v438 = vpop.f32.mrb[0].mxu0
        %v439 = vadd.f32 0.0, %v438
        %v440 = vpop.f32.mrb[0].mxu0
        %441 = vmatprep.mubr.f32.mxu0 0.0
        %442 = vmatmul.mubr.f32.gmra.mrb[0].mxu0 %v313
        %v443 = vpop.f32.mrb[0].mxu0
        %v444 = vadd.f32 0.0, %v443
        %v445 = vpop.f32.mrb[0].mxu0
        %446 = vmatprep.mubr.f32.mxu0 0.0
        %447 = vmatmul.mubr.f32.gmra.mrb[0].mxu0 %v314
        %v448 = vpop.f32.mrb[0].mxu0
        %v449 = vadd.f32 0.0, %v448
        %v450 = vpop.f32.mrb[0].mxu0
        %451 = vmatprep.mubr.f32.mxu0 0.0
        %452 = vmatmul.mubr.f32.gmra.mrb[0].mxu0 %v315
        %v453 = vpop.f32.mrb[0].mxu0
        %v454 = vadd.f32 0.0, %v453
        %v455 = vpop.f32.mrb[0].mxu0
        %456 = vmatprep.mubr.f32.mxu0 0.0
        %457 = vmatmul.mubr.f32.gmra.mrb[0].mxu0 %v316
        %v458 = vpop.f32.mrb[0].mxu0
        %v459 = vadd.f32 0.0, %v458
        %v460 = vpop.f32.mrb[0].mxu0
        %461 = vmatprep.mubr.f32.mxu0 0.0
        %462 = vmatmul.mubr.f32.gmra.mrb[0].mxu0 %v317
        %v463 = vpop.f32.mrb[0].mxu0
        %v464 = vadd.f32 0.0, %v463
        %v465 = vpop.f32.mrb[0].mxu0
        %466 = vmatprep.mubr.f32.mxu0 0.0
        %467 = vmatmul.mubr.f32.gmra.mrb[0].mxu0 %v318
        %v468 = vpop.f32.mrb[0].mxu0
        %v469 = vadd.f32 0.0, %v468
        %v470 = vpop.f32.mrb[0].mxu0
        %471 = vmatprep.mubr.f32.mxu0 0.0
        %472 = vmatmul.mubr.f32.gmra.mrb[0].mxu0 %v319
        %v473 = vpop.f32.mrb[0].mxu0
        %v474 = vadd.f32 0.0, %v473
        %v475 = vpop.f32.mrb[0].mxu0
        %476 = vmatprep.mubr.f32.mxu0 0.0
        %477 = vmatmul.mubr.f32.gmra.mrb[0].mxu0 %v320
        %v478 = vpop.f32.mrb[0].mxu0
        %v479 = vadd.f32 0.0, %v478
        %v480 = vpop.f32.mrb[0].mxu0
        %481 = vmatprep.mubr.f32.mxu0 0.0
        %482 = vmatmul.mubr.f32.gmra.mrb[0].mxu0 %v321
        %v483 = vpop.f32.mrb[0].mxu0
        %v484 = vadd.f32 0.0, %v483
        %v485 = vpop.f32.mrb[0].mxu0
        %486 = vmatprep.mubr.f32.mxu0 0.0
        %487 = vmatmul.mubr.f32.gmra.mrb[0].mxu0 %v322
        %v488 = vpop.f32.mrb[0].mxu0
        %v489 = vadd.f32 0.0, %v488
        %v490 = vpop.f32.mrb[0].mxu0
        %491 = vmatprep.mubr.f32.mxu0 0.0
        %492 = vmatmul.mubr.f32.gmra.mrb[0].mxu0 %v323
        %v493 = vpop.f32.mrb[0].mxu0
        %v494 = vadd.f32 0.0, %v493
        %v495 = vpop.f32.mrb[0].mxu0
        %496 = vmatprep.mubr.f32.mxu0 0.0
        %497 = vmatmul.mubr.f32.gmra.mrb[0].mxu0 %v324
        %v498 = vpop.f32.mrb[0].mxu0
        %v499 = vadd.f32 0.0, %v498
        %v500 = vpop.f32.mrb[0].mxu0
        %501 = vmatprep.mubr.f32.mxu0 0.0
        %502 = vmatmul.mubr.f32.gmra.mrb[0].mxu0 %v325
        %v503 = vpop.f32.mrb[0].mxu0
        %v504 = vadd.f32 0.0, %v503
        %v505 = vpop.f32.mrb[0].mxu0
        %506 = vmatprep.mubr.f32.mxu0 0.0
        %507 = vmatmul.mubr.f32.gmra.mrb[0].mxu0 %v326
        %v508 = vpop.f32.mrb[0].mxu0
        %v509 = vadd.f32 0.0, %v508
        %v510 = vpop.f32.mrb[0].mxu0
        %511 = vmatprep.mubr.f32.mxu0 0.0
        %512 = vmatmul.mubr.f32.gmra.mrb[0].mxu0 %v327
        %v513 = vpop.f32.mrb[0].mxu0
        %v514 = vadd.f32 0.0, %v513
        %v515 = vpop.f32.mrb[0].mxu0
        %516 = vmatprep.mubr.f32.mxu0 0.0
        %517 = vmatmul.mubr.f32.gmra.mrb[0].mxu0 %v328
        %v518 = vpop.f32.mrb[0].mxu0
        %v519 = vadd.f32 0.0, %v518
        %v520 = vpop.f32.mrb[0].mxu0
        %521 = vmatprep.mubr.f32.mxu0 0.0
        %522 = vmatmul.mubr.f32.gmra.mrb[0].mxu0 %v329
        %v523 = vpop.f32.mrb[0].mxu0
        %v524 = vadd.f32 0.0, %v523
        %v525 = vpop.f32.mrb[0].mxu0
        %526 = vmatprep.mubr.f32.mxu0 0.0
        %527 = vmatmul.mubr.f32.gmra.mrb[0].mxu0 %v330
        %v528 = vpop.f32.mrb[0].mxu0
        %v529 = vadd.f32 0.0, %v528
        %v530 = vpop.f32.mrb[0].mxu0
        %531 = vmatprep.mubr.f32.mxu0 0.0
        %532 = vmatmul.mubr.f32.gmra.mrb[0].mxu0 %v331
        %v533 = vpop.f32.mrb[0].mxu0
        %v534 = vadd.f32 0.0, %v533
        %v535 = vpop.f32.mrb[0].mxu0
        %536 = vmatprep.mubr.f32.mxu0 0.0
        %537 = vmatmul.mubr.f32.gmra.mrb[0].mxu0 %v332
        %v538 = vpop.f32.mrb[0].mxu0
        %v539 = vadd.f32 0.0, %v538
        %v540 = vpop.f32.mrb[0].mxu0
        %541 = vmatprep.mubr.f32.mxu0 0.0
        %542 = vmatmul.mubr.f32.gmra.mrb[0].mxu0 %v333
        %v543 = vpop.f32.mrb[0].mxu0
        %v544 = vadd.f32 0.0, %v543
        %v545 = vpop.f32.mrb[0].mxu0
        %546 = vmatprep.mubr.f32.mxu0 0.0
        %547 = vmatmul.mubr.f32.gmra.mrb[0].mxu0 %v334
        %v548 = vpop.f32.mrb[0].mxu0
        %v549 = vadd.f32 0.0, %v548
        %v550 = vpop.f32.mrb[0].mxu0
        %551 = vmatprep.mubr.f32.mxu0 0.0
        %552 = vmatmul.mubr.f32.gmra.mrb[0].mxu0 %v335
        %v553 = vpop.f32.mrb[0].mxu0
        %v554 = vadd.f32 0.0, %v553
        %v555 = vpop.f32.mrb[0].mxu0
        %556 = vmatprep.mubr.f32.mxu0 0.0
        %557 = vmatmul.mubr.f32.gmra.mrb[0].mxu0 %v336
        %v558 = vpop.f32.mrb[0].mxu0
        %v559 = vadd.f32 0.0, %v558
        %v560 = vpop.f32.mrb[0].mxu0
        %561 = vmatprep.mubr.f32.mxu0 0.0
        %562 = vmatmul.mubr.f32.gmra.mrb[0].mxu0 %v337
        %v563 = vpop.f32.mrb[0].mxu0
        %v564 = vadd.f32 0.0, %v563
        %v565 = vpop.f32.mrb[0].mxu0
        %566 = vmatprep.mubr.f32.mxu0 0.0
        %567 = vmatmul.mubr.f32.gmra.mrb[0].mxu0 %v338
        %v568 = vpop.f32.mrb[0].mxu0
        %v569 = vadd.f32 0.0, %v568
        %v570 = vpop.f32.mrb[0].mxu0
        %571 = vmatprep.mubr.f32.mxu0 0.0
        %572 = vmatmul.mubr.f32.gmra.mrb[0].mxu0 %v339
        %v573 = vpop.f32.mrb[0].mxu0
        %v574 = vadd.f32 0.0, %v573
        %v575 = vpop.f32.mrb[0].mxu0
        %576 = vmatprep.mubr.f32.mxu0 0.0
        %577 = vmatmul.mubr.f32.gmra.mrb[0].mxu0 %v340
        %v578 = vpop.f32.mrb[0].mxu0
        %v579 = vadd.f32 0.0, %v578
        %v580 = vpop.f32.mrb[0].mxu0
        %581 = vdwg.mxu0
        %v582 = vadd.f32 %v277, %v424
        %v583 = vadd.f32 %v278, %v429
        %v584 = vadd.f32 %v279, %v434
        %v585 = vadd.f32 %v280, %v439
        %v586 = vadd.f32 %v281, %v444
        %v587 = vadd.f32 %v282, %v449
        %v588 = vadd.f32 %v283, %v454
        %v589 = vadd.f32 %v284, %v459
        %v590 = vadd.f32 %v285, %v464
        %v591 = vadd.f32 %v286, %v469
        %v592 = vadd.f32 %v287, %v474
        %v593 = vadd.f32 %v288, %v479
        %v594 = vadd.f32 %v289, %v484
        %v595 = vadd.f32 %v290, %v489
        %v596 = vadd.f32 %v291, %v494
        %v597 = vadd.f32 %v292, %v499
        %v598 = vadd.f32 %v293, %v504
        %v599 = vadd.f32 %v294, %v509
        %v600 = vadd.f32 %v295, %v514
        %v601 = vadd.f32 %v296, %v519
        %v602 = vadd.f32 %v297, %v524
        %v603 = vadd.f32 %v298, %v529
        %v604 = vadd.f32 %v299, %v534
        %v605 = vadd.f32 %v300, %v539
        %v606 = vadd.f32 %v301, %v544
        %v607 = vadd.f32 %v302, %v549
        %v608 = vadd.f32 %v303, %v554
        %v609 = vadd.f32 %v304, %v559
        %v610 = vadd.f32 %v305, %v564
        %v611 = vadd.f32 %v306, %v569
        %v612 = vadd.f32 %v307, %v574
        %v613 = vadd.f32 %v308, %v579
        %614 = vst [vmem:[#allocation2] sm:$0xff] %v582
        %615 = vst [vmem:[#allocation2 + $0x8] sm:$0xff] %v583
        %616 = vst [vmem:[#allocation2 + $0x10] sm:$0xff] %v584
        %617 = vst [vmem:[#allocation2 + $0x18] sm:$0xff] %v585
        %618 = vst [vmem:[#allocation2 + $0x20] sm:$0xff] %v586
        %619 = vst [vmem:[#allocation2 + $0x28] sm:$0xff] %v587
        %620 = vst [vmem:[#allocation2 + $0x30] sm:$0xff] %v588
        %621 = vst [vmem:[#allocation2 + $0x38] sm:$0xff] %v589
        %622 = vst [vmem:[#allocation2 + $0x40] sm:$0xff] %v590
        %623 = vst [vmem:[#allocation2 + $0x48] sm:$0xff] %v591
        %624 = vst [vmem:[#allocation2 + $0x50] sm:$0xff] %v592
        %625 = vst [vmem:[#allocation2 + $0x58] sm:$0xff] %v593
        %626 = vst [vmem:[#allocation2 + $0x60] sm:$0xff] %v594
        %627 = vst [vmem:[#allocation2 + $0x68] sm:$0xff] %v595
        %628 = vst [vmem:[#allocation2 + $0x70] sm:$0xff] %v596
        %629 = vst [vmem:[#allocation2 + $0x78] sm:$0xff] %v597
        %630 = vst [vmem:[#allocation2 + $0x80] sm:$0xff] %v598
        %631 = vst [vmem:[#allocation2 + $0x88] sm:$0xff] %v599
        %632 = vst [vmem:[#allocation2 + $0x90] sm:$0xff] %v600
        %633 = vst [vmem:[#allocation2 + $0x98] sm:$0xff] %v601
        %634 = vst [vmem:[#allocation2 + $0xa0] sm:$0xff] %v602
        %635 = vst [vmem:[#allocation2 + $0xa8] sm:$0xff] %v603
        %636 = vst [vmem:[#allocation2 + $0xb0] sm:$0xff] %v604
        %637 = vst [vmem:[#allocation2 + $0xb8] sm:$0xff] %v605
        %638 = vst [vmem:[#allocation2 + $0xc0] sm:$0xff] %v606
        %639 = vst [vmem:[#allocation2 + $0xc8] sm:$0xff] %v607
        %640 = vst [vmem:[#allocation2 + $0xd0] sm:$0xff] %v608
        %641 = vst [vmem:[#allocation2 + $0xd8] sm:$0xff] %v609
        %642 = vst [vmem:[#allocation2 + $0xe0] sm:$0xff] %v610
        %643 = vst [vmem:[#allocation2 + $0xe8] sm:$0xff] %v611
        %644 = vst [vmem:[#allocation2 + $0xf0] sm:$0xff] %v612
        %645 = vst [vmem:[#allocation2 + $0xf8] sm:$0xff] %v613
        // Predicated region
        $region41: #{tpu_custom_call.1} parent=27 // pred_check
          %p646 = pneg %p241
        $region42: #{tpu_custom_call.1} parent=27 // pred_check_branch
          %648 = sbr.rel (%p646) target = $region44
        $region43: #{tpu_custom_call.1} parent=27 // pred_region
          %v649 = vld [vmem:[#allocation2] sm:$0xff]
          %v650 = vld [vmem:[#allocation2 + $0x8] sm:$0xff]
          %v651 = vld [vmem:[#allocation2 + $0x10] sm:$0xff]
          %v652 = vld [vmem:[#allocation2 + $0x18] sm:$0xff]
          %v653 = vld [vmem:[#allocation2 + $0x20] sm:$0xff]
          %v654 = vld [vmem:[#allocation2 + $0x28] sm:$0xff]
          %v655 = vld [vmem:[#allocation2 + $0x30] sm:$0xff]
          %v656 = vld [vmem:[#allocation2 + $0x38] sm:$0xff]
          %v657 = vld [vmem:[#allocation2 + $0x40] sm:$0xff]
          %v658 = vld [vmem:[#allocation2 + $0x48] sm:$0xff]
          %v659 = vld [vmem:[#allocation2 + $0x50] sm:$0xff]
          %v660 = vld [vmem:[#allocation2 + $0x58] sm:$0xff]
          %v661 = vld [vmem:[#allocation2 + $0x60] sm:$0xff]
          %v662 = vld [vmem:[#allocation2 + $0x68] sm:$0xff]
          %v663 = vld [vmem:[#allocation2 + $0x70] sm:$0xff]
          %v664 = vld [vmem:[#allocation2 + $0x78] sm:$0xff]
          %v665 = vld [vmem:[#allocation2 + $0x80] sm:$0xff]
          %v666 = vld [vmem:[#allocation2 + $0x88] sm:$0xff]
          %v667 = vld [vmem:[#allocation2 + $0x90] sm:$0xff]
          %v668 = vld [vmem:[#allocation2 + $0x98] sm:$0xff]
          %v669 = vld [vmem:[#allocation2 + $0xa0] sm:$0xff]
          %v670 = vld [vmem:[#allocation2 + $0xa8] sm:$0xff]
          %v671 = vld [vmem:[#allocation2 + $0xb0] sm:$0xff]
          %v672 = vld [vmem:[#allocation2 + $0xb8] sm:$0xff]
          %v673 = vld [vmem:[#allocation2 + $0xc0] sm:$0xff]
          %v674 = vld [vmem:[#allocation2 + $0xc8] sm:$0xff]
          %v675 = vld [vmem:[#allocation2 + $0xd0] sm:$0xff]
          %v676 = vld [vmem:[#allocation2 + $0xd8] sm:$0xff]
          %v677 = vld [vmem:[#allocation2 + $0xe0] sm:$0xff]
          %v678 = vld [vmem:[#allocation2 + $0xe8] sm:$0xff]
          %v679 = vld [vmem:[#allocation2 + $0xf0] sm:$0xff]
          %v680 = vld [vmem:[#allocation2 + $0xf8] sm:$0xff]
          %681 = vst [vmem:[%s230] sm:$0xff] %v649
          %682 = vst [vmem:[%s230 + $0x8] sm:$0xff] %v650
          %683 = vst [vmem:[%s230 + $0x10] sm:$0xff] %v651
          %684 = vst [vmem:[%s230 + $0x18] sm:$0xff] %v652
          %685 = vst [vmem:[%s230 + $0x20] sm:$0xff] %v653
          %686 = vst [vmem:[%s230 + $0x28] sm:$0xff] %v654
          %687 = vst [vmem:[%s230 + $0x30] sm:$0xff] %v655
          %688 = vst [vmem:[%s230 + $0x38] sm:$0xff] %v656
          %689 = vst [vmem:[%s230 + $0x40] sm:$0xff] %v657
          %690 = vst [vmem:[%s230 + $0x48] sm:$0xff] %v658
          %691 = vst [vmem:[%s230 + $0x50] sm:$0xff] %v659
          %692 = vst [vmem:[%s230 + $0x58] sm:$0xff] %v660
          %693 = vst [vmem:[%s230 + $0x60] sm:$0xff] %v661
          %694 = vst [vmem:[%s230 + $0x68] sm:$0xff] %v662
          %695 = vst [vmem:[%s230 + $0x70] sm:$0xff] %v663
          %696 = vst [vmem:[%s230 + $0x78] sm:$0xff] %v664
          %697 = vst [vmem:[%s230 + $0x80] sm:$0xff] %v665
          %698 = vst [vmem:[%s230 + $0x88] sm:$0xff] %v666
          %699 = vst [vmem:[%s230 + $0x90] sm:$0xff] %v667
          %700 = vst [vmem:[%s230 + $0x98] sm:$0xff] %v668
          %701 = vst [vmem:[%s230 + $0xa0] sm:$0xff] %v669
          %702 = vst [vmem:[%s230 + $0xa8] sm:$0xff] %v670
          %703 = vst [vmem:[%s230 + $0xb0] sm:$0xff] %v671
          %704 = vst [vmem:[%s230 + $0xb8] sm:$0xff] %v672
          %705 = vst [vmem:[%s230 + $0xc0] sm:$0xff] %v673
          %706 = vst [vmem:[%s230 + $0xc8] sm:$0xff] %v674
          %707 = vst [vmem:[%s230 + $0xd0] sm:$0xff] %v675
          %708 = vst [vmem:[%s230 + $0xd8] sm:$0xff] %v676
          %709 = vst [vmem:[%s230 + $0xe0] sm:$0xff] %v677
          %710 = vst [vmem:[%s230 + $0xe8] sm:$0xff] %v678
          %711 = vst [vmem:[%s230 + $0xf0] sm:$0xff] %v679
          %712 = vst [vmem:[%s230 + $0xf8] sm:$0xff] %v680
          %v713 = vadd.f32 %v649, %v650
          %v714 = vadd.f32 %v713, %v651
          %v715 = vadd.f32 %v714, %v652
          %v716 = vadd.f32 %v715, %v653
          %v717 = vadd.f32 %v716, %v654
          %v718 = vadd.f32 %v717, %v655
          %v719 = vadd.f32 %v718, %v656
          %v720 = vadd.f32 %v719, %v657
          %v721 = vadd.f32 %v720, %v658
          %v722 = vadd.f32 %v721, %v659
          %v723 = vadd.f32 %v722, %v660
          %v724 = vadd.f32 %v723, %v661
          %v725 = vadd.f32 %v724, %v662
          %v726 = vadd.f32 %v725, %v663
          %v727 = vadd.f32 %v726, %v664
          %v728 = vadd.f32 %v727, %v665
          %v729 = vadd.f32 %v728, %v666
          %v730 = vadd.f32 %v729, %v667
          %v731 = vadd.f32 %v730, %v668
          %v732 = vadd.f32 %v731, %v669
          %v733 = vadd.f32 %v732, %v670
          %v734 = vadd.f32 %v733, %v671
          %v735 = vadd.f32 %v734, %v672
          %v736 = vadd.f32 %v735, %v673
          %v737 = vadd.f32 %v736, %v674
          %v738 = vadd.f32 %v737, %v675
          %v739 = vadd.f32 %v738, %v676
          %v740 = vadd.f32 %v739, %v677
          %v741 = vadd.f32 %v740, %v678
          %v742 = vadd.f32 %v741, %v679
          %v743 = vadd.f32 %v742, %v680
          %v744 = vrot.slane %v743, 4
          %v745 = vadd.f32 %v743, %v744
          %v746 = vrot.slane %v745, 2
          %v747 = vadd.f32 %v745, %v746
          %v748 = vrot.slane %v747, 1
          %v749 = vadd.f32 %v747, %v748
          %v750 = vmul.f32 %v649, %v649
          %v751 = vmul.f32 %v650, %v650
          %v752 = vmul.f32 %v651, %v651
          %v753 = vmul.f32 %v652, %v652
          %v754 = vmul.f32 %v653, %v653
          %v755 = vmul.f32 %v654, %v654
          %v756 = vmul.f32 %v655, %v655
          %v757 = vmul.f32 %v656, %v656
          %v758 = vmul.f32 %v657, %v657
          %v759 = vmul.f32 %v658, %v658
          %v760 = vmul.f32 %v659, %v659
          %v761 = vmul.f32 %v660, %v660
          %v762 = vmul.f32 %v661, %v661
          %v763 = vmul.f32 %v662, %v662
          %v764 = vmul.f32 %v663, %v663
          %v765 = vmul.f32 %v664, %v664
          %v766 = vmul.f32 %v665, %v665
          %v767 = vmul.f32 %v666, %v666
          %v768 = vmul.f32 %v667, %v667
          %v769 = vmul.f32 %v668, %v668
          %v770 = vmul.f32 %v669, %v669
          %v771 = vmul.f32 %v670, %v670
          %v772 = vmul.f32 %v671, %v671
          %v773 = vmul.f32 %v672, %v672
          %v774 = vmul.f32 %v673, %v673
          %v775 = vmul.f32 %v674, %v674
          %v776 = vmul.f32 %v675, %v675
          %v777 = vmul.f32 %v676, %v676
          %v778 = vmul.f32 %v677, %v677
          %v779 = vmul.f32 %v678, %v678
          %v780 = vmul.f32 %v679, %v679
          %v781 = vmul.f32 %v680, %v680
          %v782 = vadd.f32 %v750, %v751
          %v783 = vadd.f32 %v782, %v752
          %v784 = vadd.f32 %v783, %v753
          %v785 = vadd.f32 %v784, %v754
          %v786 = vadd.f32 %v785, %v755
          %v787 = vadd.f32 %v786, %v756
          %v788 = vadd.f32 %v787, %v757
          %v789 = vadd.f32 %v788, %v758
          %v790 = vadd.f32 %v789, %v759
          %v791 = vadd.f32 %v790, %v760
          %v792 = vadd.f32 %v791, %v761
          %v793 = vadd.f32 %v792, %v762
          %v794 = vadd.f32 %v793, %v763
          %v795 = vadd.f32 %v794, %v764
          %v796 = vadd.f32 %v795, %v765
          %v797 = vadd.f32 %v796, %v766
          %v798 = vadd.f32 %v797, %v767
          %v799 = vadd.f32 %v798, %v768
          %v800 = vadd.f32 %v799, %v769
          %v801 = vadd.f32 %v800, %v770
          %v802 = vadd.f32 %v801, %v771
          %v803 = vadd.f32 %v802, %v772
          %v804 = vadd.f32 %v803, %v773
          %v805 = vadd.f32 %v804, %v774
          %v806 = vadd.f32 %v805, %v775
          %v807 = vadd.f32 %v806, %v776
          %v808 = vadd.f32 %v807, %v777
          %v809 = vadd.f32 %v808, %v778
          %v810 = vadd.f32 %v809, %v779
          %v811 = vadd.f32 %v810, %v780
          %v812 = vadd.f32 %v811, %v781
          %v813 = vrot.slane %v812, 4
          %v814 = vadd.f32 %v812, %v813
          %v815 = vrot.slane %v814, 2
          %v816 = vadd.f32 %v814, %v815
          %v817 = vrot.slane %v816, 1
          %v818 = vadd.f32 %v816, %v817
          %vm819 = vcmask 1040384
          %v820 = vsel %vm819, %v749, %v818
          %821 = vst [vmem:[%s237] sm:$0x3] %v820
        $region44: #{tpu_custom_call.1} parent=27 // pred_fallthru
          _
        %s822 = sand.u32 %s99, 1
        %s823 = scalar_lea.sflag [#allocation5], %s822
        %s824 = sand.u32 %s99, 1
        %s825 = smul.addr %s824, 256
        %s826 = scalar_lea.vmem [#allocation8], %s825
        %s827 = sand.u32 %s125, 1
        %s828 = scalar_lea.sflag [#allocation10], %s827
        %s829 = sand.u32 %s125, 1
        %s830 = smul.addr %s829, 2
        %s831 = scalar_lea.vmem [#allocation9], %s830
        // Predicated region
        $region45: #{tpu_custom_call.1} parent=27 // pred_check
          %p832 = pneg %p109
        $region46: #{tpu_custom_call.1} parent=27 // pred_check_branch
          %834 = sbr.rel (%p832) target = $region48
        $region47: #{tpu_custom_call.1} parent=27 // pred_region
          %s835 = smul.u32 32, %s29
          %s837 = ssub.s32 4096, 4096
          %838 = vsyncadd %s823, %s837
          %s839 = smul.addr %s835, 128
          %s840 = scalar_lea.hbm %s2, %s839
          %s841 = sshll.u32 %s826, 4
          %s842 = int_to_ptr.vmem [resolvable:$true] %s841
          %847 = dma.vmem_to_hbm [thread:$0]  %s842, 4096, %s840, %s823, 128, 128, 8
        $region48: #{tpu_custom_call.1} parent=27 // pred_fallthru
          _
        // Predicated region
        $region49: #{tpu_custom_call.1} parent=27 // pred_check
          %p848 = pneg %p135
        $region50: #{tpu_custom_call.1} parent=27 // pred_check_branch
          %850 = sbr.rel (%p848) target = $region52
        $region51: #{tpu_custom_call.1} parent=27 // pred_region
          %s852 = ssub.s32 32, 32
          %853 = vsyncadd %s828, %s852
          %s854 = smul.addr %s29, 32
          %s855 = scalar_lea.hbm %s3, %s854
          %s857 = sshll.u32 %s831, 4
          %s858 = int_to_ptr.vmem [resolvable:$true] %s857
          %860 = dma.vmem_to_hbm [thread:$0]  %s858, 32, %s855, %s828
        $region52: #{tpu_custom_call.1} parent=27 // pred_fallthru
          _
      $region28: #{tpu_custom_call.1} parent=5 // pred_fallthru
        _
      %p861 = scmp.le.s32.totalorder 2, %s20
      // Predicated region
      $region53: #{tpu_custom_call.1} parent=5 // pred_check
        %p862 = pneg %p861
      $region54: #{tpu_custom_call.1} parent=5 // pred_check_branch
        %864 = sbr.rel (%p862) target = $region56
      $region55: #{tpu_custom_call.1} parent=5 // pred_region
        %s865 = ssub.s32 %s20, 2
        // Predicated region
        $region57: #{tpu_custom_call.1} parent=55 // pred_check
          %p866 = pneg %p115
        $region58: #{tpu_custom_call.1} parent=55 // pred_check_branch
          %868 = sbr.rel (%p866) target = $region60
        $region59: #{tpu_custom_call.1} parent=55 // pred_region
          %s869 = sand.u32 %s100, 1
          %s870 = scalar_lea.sflag [#allocation5], %s869
          %s871 = sand.u32 %s100, 1
          %s872 = smul.addr %s871, 256
          %s873 = scalar_lea.vmem [#allocation8], %s872
          %874 = dma.done %s870, 4096
        $region60: #{tpu_custom_call.1} parent=55 // pred_fallthru
          _
        // Predicated region
        $region61: #{tpu_custom_call.1} parent=55 // pred_check
          %p875 = pneg %p141
        $region62: #{tpu_custom_call.1} parent=55 // pred_check_branch
          %877 = sbr.rel (%p875) target = $region64
        $region63: #{tpu_custom_call.1} parent=55 // pred_region
          %s878 = sand.u32 %s126, 1
          %s879 = scalar_lea.sflag [#allocation10], %s878
          %s880 = sand.u32 %s126, 1
          %s881 = smul.addr %s880, 2
          %s882 = scalar_lea.vmem [#allocation9], %s881
          %883 = dma.done %s879, 32
        $region64: #{tpu_custom_call.1} parent=55 // pred_fallthru
          _
      $region56: #{tpu_custom_call.1} parent=5 // pred_fallthru
        _
    $region6: #{tpu_custom_call.1} parent=1 // loop_footer
      %s24 = sadd.s32 1, %s20
    $region7: #{tpu_custom_call.1} parent=1 // loop_footer_branch
      %19 = sbr.rel target = $region3
    $region8: #{tpu_custom_call.1} parent=1 // loop_exit
      _
    %884 = vsyncpa [#allocation4], 1
    %s885 = scalar_lea.sflag [#allocation4], 1
    %886 = vsyncpa %s885, 1
    %887 = vsyncpa [#allocation7], 1
    %888 = vsyncpa [#allocation5], 1
    %s889 = scalar_lea.sflag [#allocation5], 1
    %890 = vsyncpa %s889, 1
    %891 = vsyncpa [#allocation10], 1
    %s892 = scalar_lea.sflag [#allocation10], 1
    %893 = vsyncpa %s892, 1

</llo_original>
